<compile_context>
chip_gen: v7x
topology: tpu7x:2x2x1
jax: 0.10.0
libtpu: 0.0.40
codegen_flags: <defaults>
</compile_context>

<pallas_src>
import jax
import jax.numpy as jnp
from jax.experimental import pallas as pl
from jax.experimental.pallas import tpu as pltpu


def pgn_mlp_kernel(x_ref, w1_ref, b1_ref, w2_ref, b2_ref, o_ref):
    """Fused Linear -> ReLU -> Linear on one batch tile (batch on lane axis).

    Shapes inside the kernel (TB = batch tile width, lane axis):
      x:  (D_in, TB)   w1: (H, D_in)   b1: (H, 1)
      w2: (A_pad, H)   b2: (A_pad, 1)  o:  (A_pad, TB)
    """
    xT = x_ref[...]                       # (D_in, TB) f32
    w1T = w1_ref[...]                     # (H, D_in)
    d_in = xT.shape[0]

    # Layer 1: K = d_in is tiny (4) -> unrolled outer-product FMAs on the VPU
    # instead of a degenerate K=4 systolic pass on the MXU.
    h = w1T[:, 0:1] * xT[0:1, :] + b1_ref[...]            # (H, TB)
    for k in range(1, d_in):                              # static Python unroll
        h = h + w1T[:, k:k + 1] * xT[k:k + 1, :]
    h = jnp.maximum(h, 0.0)                               # ReLU (VPU)

    # Layer 2: (A_pad, H) @ (H, TB) — the real MXU matmul, f32 accumulation.
    # Padded rows of w2/b2 are zero, so padded output rows are exactly zero.
    y = jnp.dot(w2_ref[...], h, preferred_element_type=jnp.float32)
    o_ref[...] = (y + b2_ref[...]).astype(o_ref.dtype)
    # TODO(synk): downstream softmax / log-prob / action sampling could be
    # fused here on the idle EUP/XLU slots, but the PyTorch module returns raw
    # logits, so forward semantics are kept unchanged.


def pgn_forward(x, w1, b1, w2, b2, *, block_b=1024, small_batch=256):
    """y = relu(x @ w1 + b1) @ w2 + b2 as a single fused Pallas call.

    Weights are stored as (in_features, out_features), i.e. already transposed
    relative to PyTorch's (out, in): mathematically identical to x @ W.T + b.
    Internally the problem is transposed so the batch rides the 128-lane axis.
    """
    B, d_in = x.shape
    H = w1.shape[1]
    A = w2.shape[1]

    # Transposed, sublane-aligned parameters (tiny one-time layout plumbing).
    A_pad = 8 * pl.cdiv(A, 8)                              # sublane-aligned rows
    w1T = w1.T                                             # (H, d_in)
    b1T = b1.reshape(H, 1)                                 # (H, 1)
    w2T = jnp.pad(w2.T, ((0, A_pad - A), (0, 0)))          # (A_pad, H), zero rows
    b2T = jnp.pad(b2.reshape(A, 1), ((0, A_pad - A), (0, 0)))

    xT = x.T                                               # (d_in, B), lane-dense batch

    if B <= small_batch:
        # Per-env-step inference: one full-extent block, no batch padding,
        # grid=(1,).  Full-extent dims are exempt from the (8,128) rule.
        blk, B_tot = B, B
    else:
        # Throughput mode (rollout batches): big lane tiles, but cap the tile
        # at ceil(B/2) rounded to 128 so the grid always has >= 2 steps and
        # the "parallel" batch axis spans both TensorCores on v7x.
        half = 128 * pl.cdiv(pl.cdiv(B, 2), 128)
        blk = min(block_b, half)
        B_tot = blk * pl.cdiv(B, blk)
        if B_tot != B:
            xT = jnp.pad(xT, ((0, 0), (0, B_tot - B)))     # padded cols sliced off below
    grid = (B_tot // blk,)

    flops = 2 * B_tot * (d_in * H + H * A_pad)
    bytes_accessed = int(
        d_in * B_tot * 4
        + (w1T.size + b1T.size + w2T.size + b2T.size) * 4
        + A_pad * B_tot * 4)

    out = pl.pallas_call(
        pgn_mlp_kernel,
        out_shape=jax.ShapeDtypeStruct((A_pad, B_tot), jnp.float32),
        grid=grid,
        in_specs=[
            pl.BlockSpec((d_in, blk), lambda i: (0, i)),    # x tile (pipelined)
            pl.BlockSpec((H, d_in), lambda i: (0, 0)),      # weights: VMEM-resident
            pl.BlockSpec((H, 1), lambda i: (0, 0)),
            pl.BlockSpec((A_pad, H), lambda i: (0, 0)),
            pl.BlockSpec((A_pad, 1), lambda i: (0, 0)),
        ],
        out_specs=pl.BlockSpec((A_pad, blk), lambda i: (0, i)),  # lane-dense output
        compiler_params=pltpu.CompilerParams(
            dimension_semantics=("parallel",)),             # megacore sharding (v7x)
        cost_estimate=pl.CostEstimate(
            flops=flops, transcendentals=0, bytes_accessed=bytes_accessed),
    )(xT, w1T, b1T, w2T, b2T)

    # (A_pad, B_tot) -> (B, A): drop zero-padded rows and garbage padded batch
    # columns outside the kernel (tiny XLA slice + transpose).
    return out[:A, :B].T


def init_pgn_params(key, input_size, num_actions, hidden=128):
    """Deterministic init mimicking nn.Linear's default U(-1/sqrt(fan_in), +)."""
    k1, k2, k3, k4 = jax.random.split(key, 4)
    bound1 = 1.0 / jnp.sqrt(jnp.float32(input_size))
    bound2 = 1.0 / jnp.sqrt(jnp.float32(hidden))
    # Stored as (in, out) — already transposed relative to PyTorch's (out, in).
    w1 = jax.random.uniform(k1, (input_size, hidden), jnp.float32, -bound1, bound1)
    b1 = jax.random.uniform(k2, (1, hidden), jnp.float32, -bound1, bound1)
    w2 = jax.random.uniform(k3, (hidden, num_actions), jnp.float32, -bound2, bound2)
    b2 = jax.random.uniform(k4, (1, num_actions), jnp.float32, -bound2, bound2)
    return w1, b1, w2, b2


if __name__ == "__main__":
    # CartPole: observation dim = 4, actions = 2.
    input_size, num_actions = 4, 2

    key = jax.random.PRNGKey(0)
    kx, kp, kx2 = jax.random.split(key, 3)
    w1, b1, w2, b2 = init_pgn_params(kp, input_size, num_actions)

    def ref_fwd(x):
        # Pure-JAX reference — same math as the PyTorch module.
        return jnp.maximum(x @ w1 + b1, 0.0) @ w2 + b2

    # Small batch: exercises the single-block, no-pad inference path (grid=(1,)).
    x_small = jax.random.normal(kx, (200, input_size), dtype=jnp.float32)
    out_small = jax.block_until_ready(pgn_forward(x_small, w1, b1, w2, b2))
    assert out_small.shape == (200, num_actions)
    assert jnp.allclose(out_small, ref_fwd(x_small), atol=1e-4, rtol=1e-4)

    # Larger rollout batch: exercises the tiled path (lane tiles, grid >= 2,
    # padded tail columns).
    x_big = jax.random.normal(kx2, (3000, input_size), dtype=jnp.float32)
    out_big = jax.block_until_ready(pgn_forward(x_big, w1, b1, w2, b2))
    assert out_big.shape == (3000, num_actions)
    assert jnp.allclose(out_big, ref_fwd(x_big), atol=1e-4, rtol=1e-4)

    print("KERNEL_OK")
</pallas_src>

<mosaic_0001>
module attributes {stable_mosaic.version = 11 : i64} {
  func.func @pgn_mlp_kernel(%arg0: i32, %arg1: memref<4x200xf32, #tpu.memory_space<vmem>>, %arg2: memref<128x4xf32, #tpu.memory_space<vmem>>, %arg3: memref<128x1xf32, #tpu.memory_space<vmem>>, %arg4: memref<8x128xf32, #tpu.memory_space<vmem>>, %arg5: memref<8x1xf32, #tpu.memory_space<vmem>>, %arg6: memref<8x200xf32, #tpu.memory_space<vmem>>) attributes {dimension_semantics = [#tpu.dimension_semantics<parallel>], iteration_bounds = array<i64: 1>, scalar_prefetch = 0 : i64, scratch_operands = 0 : i64, tpu.core_type = #tpu.core_type<tc>, window_params = [{transform_indices = @transform_0, window_bounds = array<i64: 4, 200>}, {pipeline_mode = #tpu.pipeline_mode<synchronous>, transform_indices = @transform_1, window_bounds = array<i64: 128, 4>}, {pipeline_mode = #tpu.pipeline_mode<synchronous>, transform_indices = @transform_2, window_bounds = array<i64: 128, 1>}, {pipeline_mode = #tpu.pipeline_mode<synchronous>, transform_indices = @transform_3, window_bounds = array<i64: 8, 128>}, {pipeline_mode = #tpu.pipeline_mode<synchronous>, transform_indices = @transform_4, window_bounds = array<i64: 8, 1>}, {transform_indices = @transform_5, window_bounds = array<i64: 8, 200>}]} {
    %c0 = arith.constant 0 : index
    %c0_0 = arith.constant 0 : index
    %0 = vector.load %arg1[%c0, %c0_0] : memref<4x200xf32, #tpu.memory_space<vmem>>, vector<4x200xf32>
    %c0_1 = arith.constant 0 : index
    %c0_2 = arith.constant 0 : index
    %1 = vector.load %arg2[%c0_1, %c0_2] : memref<128x4xf32, #tpu.memory_space<vmem>>, vector<128x4xf32>
    %2 = vector.extract_strided_slice %1 {offsets = [0, 0], sizes = [128, 1], strides = [1, 1]} : vector<128x4xf32> to vector<128x1xf32>
    %3 = vector.extract_strided_slice %0 {offsets = [0, 0], sizes = [1, 200], strides = [1, 1]} : vector<4x200xf32> to vector<1x200xf32>
    %4 = vector.broadcast %2 : vector<128x1xf32> to vector<128x200xf32>
    %5 = vector.broadcast %3 : vector<1x200xf32> to vector<128x200xf32>
    %6 = arith.mulf %4, %5 : vector<128x200xf32>
    %c0_3 = arith.constant 0 : index
    %c0_4 = arith.constant 0 : index
    %7 = vector.load %arg3[%c0_3, %c0_4] : memref<128x1xf32, #tpu.memory_space<vmem>>, vector<128x1xf32>
    %8 = vector.broadcast %7 : vector<128x1xf32> to vector<128x200xf32>
    %9 = arith.addf %6, %8 : vector<128x200xf32>
    %10 = vector.extract_strided_slice %1 {offsets = [0, 1], sizes = [128, 1], strides = [1, 1]} : vector<128x4xf32> to vector<128x1xf32>
    %11 = vector.extract_strided_slice %0 {offsets = [1, 0], sizes = [1, 200], strides = [1, 1]} : vector<4x200xf32> to vector<1x200xf32>
    %12 = vector.broadcast %10 : vector<128x1xf32> to vector<128x200xf32>
    %13 = vector.broadcast %11 : vector<1x200xf32> to vector<128x200xf32>
    %14 = arith.mulf %12, %13 : vector<128x200xf32>
    %15 = arith.addf %9, %14 : vector<128x200xf32>
    %16 = vector.extract_strided_slice %1 {offsets = [0, 2], sizes = [128, 1], strides = [1, 1]} : vector<128x4xf32> to vector<128x1xf32>
    %17 = vector.extract_strided_slice %0 {offsets = [2, 0], sizes = [1, 200], strides = [1, 1]} : vector<4x200xf32> to vector<1x200xf32>
    %18 = vector.broadcast %16 : vector<128x1xf32> to vector<128x200xf32>
    %19 = vector.broadcast %17 : vector<1x200xf32> to vector<128x200xf32>
    %20 = arith.mulf %18, %19 : vector<128x200xf32>
    %21 = arith.addf %15, %20 : vector<128x200xf32>
    %22 = vector.extract_strided_slice %1 {offsets = [0, 3], sizes = [128, 1], strides = [1, 1]} : vector<128x4xf32> to vector<128x1xf32>
    %23 = vector.extract_strided_slice %0 {offsets = [3, 0], sizes = [1, 200], strides = [1, 1]} : vector<4x200xf32> to vector<1x200xf32>
    %24 = vector.broadcast %22 : vector<128x1xf32> to vector<128x200xf32>
    %25 = vector.broadcast %23 : vector<1x200xf32> to vector<128x200xf32>
    %26 = arith.mulf %24, %25 : vector<128x200xf32>
    %27 = arith.addf %21, %26 : vector<128x200xf32>
    %cst = arith.constant 0.000000e+00 : f32
    %28 = vector.broadcast %cst : f32 to vector<128x200xf32>
    %29 = arith.maximumf %27, %28 : vector<128x200xf32>
    %c0_5 = arith.constant 0 : index
    %c0_6 = arith.constant 0 : index
    %30 = vector.load %arg4[%c0_5, %c0_6] : memref<8x128xf32, #tpu.memory_space<vmem>>, vector<8x128xf32>
    %cst_7 = arith.constant dense<0.000000e+00> : vector<8x200xf32>
    %31 = tpu.matmul %30, %29, %cst_7 {dimension_numbers = #tpu.dot_dimension_numbers<[1], [0], [0], [1], [0, 0, 1, 1], [], []>} : vector<8x128xf32>, vector<128x200xf32>, vector<8x200xf32> -> vector<8x200xf32>
    %c0_8 = arith.constant 0 : index
    %c0_9 = arith.constant 0 : index
    %32 = vector.load %arg5[%c0_8, %c0_9] : memref<8x1xf32, #tpu.memory_space<vmem>>, vector<8x1xf32>
    %33 = vector.broadcast %32 : vector<8x1xf32> to vector<8x200xf32>
    %34 = arith.addf %31, %33 : vector<8x200xf32>
    %c0_10 = arith.constant 0 : index
    %c0_11 = arith.constant 0 : index
    %35 = vector.load %arg6[%c0_10, %c0_11] : memref<8x200xf32, #tpu.memory_space<vmem>>, vector<8x200xf32>
    tpu.vector_store %arg6[%c0_10, %c0_11], %34 {strides = array<i32>} : memref<8x200xf32, #tpu.memory_space<vmem>>, vector<8x200xf32>,
    return
  }
  func.func @transform_0(%arg0: i32) -> (i32, i32) {
    %c0_i32 = arith.constant 0 : i32
    %c0_i32_0 = arith.constant 0 : i32
    return %c0_i32, %arg0 : i32, i32
  }
  func.func @transform_1(%arg0: i32) -> (i32, i32) {
    %c0_i32 = arith.constant 0 : i32
    %c0_i32_0 = arith.constant 0 : i32
    %c0_i32_1 = arith.constant 0 : i32
    return %c0_i32, %c0_i32_0 : i32, i32
  }
  func.func @transform_2(%arg0: i32) -> (i32, i32) {
    %c0_i32 = arith.constant 0 : i32
    %c0_i32_0 = arith.constant 0 : i32
    %c0_i32_1 = arith.constant 0 : i32
    return %c0_i32, %c0_i32_0 : i32, i32
  }
  func.func @transform_3(%arg0: i32) -> (i32, i32) {
    %c0_i32 = arith.constant 0 : i32
    %c0_i32_0 = arith.constant 0 : i32
    %c0_i32_1 = arith.constant 0 : i32
    return %c0_i32, %c0_i32_0 : i32, i32
  }
  func.func @transform_4(%arg0: i32) -> (i32, i32) {
    %c0_i32 = arith.constant 0 : i32
    %c0_i32_0 = arith.constant 0 : i32
    %c0_i32_1 = arith.constant 0 : i32
    return %c0_i32, %c0_i32_0 : i32, i32
  }
  func.func @transform_5(%arg0: i32) -> (i32, i32) {
    %c0_i32 = arith.constant 0 : i32
    %c0_i32_0 = arith.constant 0 : i32
    return %c0_i32, %arg0 : i32, i32
  }
}

</mosaic_0001>

<llo_original>
// kernel: tpu_custom_call.1
$region0: #{tpu_custom_call.1}
  #allocation0 [shape = 'u32[]', space=smem, size = 0x4, offset = 0x4, fixed_abs, tag = 'smem constant byte address 0x4 - core index']
  #allocation1 [shape = 'u32[144,128]{1,0:T(1,128)}', space=vmem, size = 0x12000, scoped, tag = 'internal scratch']
  %s0 = inlined_call_operand.vmem [shape: f32[4,200], index: 0, kind: input, shape index: {}]
  %s1 = inlined_call_operand.vmem [shape: f32[128,4], index: 1, kind: input, shape index: {}]
  %s2 = inlined_call_operand.vmem [shape: f32[128,1], index: 2, kind: input, shape index: {}]
  %s3 = inlined_call_operand.vmem [shape: f32[8,128], index: 3, kind: input, shape index: {}]
  %s4 = inlined_call_operand.vmem [shape: f32[8,1], index: 4, kind: input, shape index: {}]
  %s5 = inlined_call_operand.hbm [shape: f32[8,200], index: 5, kind: output, shape index: {}]
  %s6 = sld [smem:[#allocation0]]
  $region30: #{tpu_custom_call.1} parent=0
    _
  %s8 = ssub.s32 1, %s6
  %s9 = scalar_select 0, %s8, %s6
  $region1: #{tpu_custom_call.1} parent=0
    #allocation2 [shape = 'u8[8192]{0}', space=vmem, size = 0x2000, scoped, tag = 'output window, operand 0, single buffered']
    #allocation3 [shape = 's32[1]{0}', space=sflag, size = 0x4, scoped, tag = 'scoped memory for tpu_custom_call.1']
    %10 = vsyncpa [#allocation3], 0
    // Predicated region
    $region2: #{tpu_custom_call.1} parent=1 // pred_check
      _
    $region3: #{tpu_custom_call.1} parent=1 // pred_check_branch
      %12 = sbr.rel (0) target = $region5
    $region4: #{tpu_custom_call.1} parent=1 // pred_region
      _
    $region5: #{tpu_custom_call.1} parent=1 // pred_fallthru
      _
    // Predicated region
    $region6: #{tpu_custom_call.1} parent=1 // pred_check
      _
    $region7: #{tpu_custom_call.1} parent=1 // pred_check_branch
      %14 = sbr.rel (0) target = $region9
    $region8: #{tpu_custom_call.1} parent=1 // pred_region
      _
    $region9: #{tpu_custom_call.1} parent=1 // pred_fallthru
      _
    // Predicated region
    $region10: #{tpu_custom_call.1} parent=1 // pred_check
      _
    $region11: #{tpu_custom_call.1} parent=1 // pred_check_branch
      %16 = sbr.rel (0) target = $region13
    $region12: #{tpu_custom_call.1} parent=1 // pred_region
      _
    $region13: #{tpu_custom_call.1} parent=1 // pred_fallthru
      _
    // Predicated region
    $region14: #{tpu_custom_call.1} parent=1 // pred_check
      _
    $region15: #{tpu_custom_call.1} parent=1 // pred_check_branch
      %18 = sbr.rel (0) target = $region17
    $region16: #{tpu_custom_call.1} parent=1 // pred_region
      _
    $region17: #{tpu_custom_call.1} parent=1 // pred_fallthru
      _
    // Predicated region
    $region18: #{tpu_custom_call.1} parent=1 // pred_check
      _
    $region19: #{tpu_custom_call.1} parent=1 // pred_check_branch
      %20 = sbr.rel (0) target = $region21
    $region20: #{tpu_custom_call.1} parent=1 // pred_region
      _
    $region21: #{tpu_custom_call.1} parent=1 // pred_fallthru
      _
    %v21 = vld [vmem:[%s0] sm:$0xff]
    %v22 = vld [vmem:[%s1] sm:$0xff]
    %v23 = vld [vmem:[%s1 + $0x8] sm:$0xff]
    %v24 = vld [vmem:[%s1 + $0x10] sm:$0xff]
    %v25 = vld [vmem:[%s1 + $0x18] sm:$0xff]
    %v26 = vld [vmem:[%s1 + $0x20] sm:$0xff]
    %v27 = vld [vmem:[%s1 + $0x28] sm:$0xff]
    %v28 = vld [vmem:[%s1 + $0x30] sm:$0xff]
    %v29 = vld [vmem:[%s1 + $0x38] sm:$0xff]
    %v30 = vld [vmem:[%s1 + $0x40] sm:$0xff]
    %v31 = vld [vmem:[%s1 + $0x48] sm:$0xff]
    %v32 = vld [vmem:[%s1 + $0x50] sm:$0xff]
    %v33 = vld [vmem:[%s1 + $0x58] sm:$0xff]
    %v34 = vld [vmem:[%s1 + $0x60] sm:$0xff]
    %v35 = vld [vmem:[%s1 + $0x68] sm:$0xff]
    %v36 = vld [vmem:[%s1 + $0x70] sm:$0xff]
    %v37 = vld [vmem:[%s1 + $0x78] sm:$0xff]
    %39 = vset.pattern.permute.xlu0 0
    %40 = vperm.xlu0 %39, %v22
    %v41 = vpop.permute.xlu0 %40
    %44 = vset.pattern.permute.xlu0 0
    %45 = vperm.xlu0 %44, %v23
    %v46 = vpop.permute.xlu0 %45
    %49 = vset.pattern.permute.xlu0 0
    %50 = vperm.xlu0 %49, %v24
    %v51 = vpop.permute.xlu0 %50
    %54 = vset.pattern.permute.xlu0 0
    %55 = vperm.xlu0 %54, %v25
    %v56 = vpop.permute.xlu0 %55
    %59 = vset.pattern.permute.xlu0 0
    %60 = vperm.xlu0 %59, %v26
    %v61 = vpop.permute.xlu0 %60
    %64 = vset.pattern.permute.xlu0 0
    %65 = vperm.xlu0 %64, %v27
    %v66 = vpop.permute.xlu0 %65
    %69 = vset.pattern.permute.xlu0 0
    %70 = vperm.xlu0 %69, %v28
    %v71 = vpop.permute.xlu0 %70
    %74 = vset.pattern.permute.xlu0 0
    %75 = vperm.xlu0 %74, %v29
    %v76 = vpop.permute.xlu0 %75
    %79 = vset.pattern.permute.xlu0 0
    %80 = vperm.xlu0 %79, %v30
    %v81 = vpop.permute.xlu0 %80
    %84 = vset.pattern.permute.xlu0 0
    %85 = vperm.xlu0 %84, %v31
    %v86 = vpop.permute.xlu0 %85
    %89 = vset.pattern.permute.xlu0 0
    %90 = vperm.xlu0 %89, %v32
    %v91 = vpop.permute.xlu0 %90
    %94 = vset.pattern.permute.xlu0 0
    %95 = vperm.xlu0 %94, %v33
    %v96 = vpop.permute.xlu0 %95
    %99 = vset.pattern.permute.xlu0 0
    %100 = vperm.xlu0 %99, %v34
    %v101 = vpop.permute.xlu0 %100
    %104 = vset.pattern.permute.xlu0 0
    %105 = vperm.xlu0 %104, %v35
    %v106 = vpop.permute.xlu0 %105
    %109 = vset.pattern.permute.xlu0 0
    %110 = vperm.xlu0 %109, %v36
    %v111 = vpop.permute.xlu0 %110
    %114 = vset.pattern.permute.xlu0 0
    %115 = vperm.xlu0 %114, %v37
    %v116 = vpop.permute.xlu0 %115
    %v119 = vlaneseq
    %v120 = vshrl.u32 %v119, 7
    %v121 = vsub.s32 0, %v120
    %v122 = vrot.slane %v21, %v121
    %v123 = vlaneseq
    %v124 = vshrl.u32 %v123, 7
    %v125 = vsub.s32 4, %v124
    %v126 = vrot.slane %v21, %v125
    %v129 = vlaneseq
    %v130 = vshrl.u32 %v129, 7
    %v131 = vsub.s32 0, %v130
    %v132 = vrot.slane %v122, %v131
    %v133 = vlaneseq
    %v134 = vshrl.u32 %v133, 7
    %v135 = vsub.s32 0, %v134
    %v136 = vrot.slane %v126, %v135
    %v137 = vmul.f32 %v41, %v132
    %v138 = vmul.f32 %v41, %v136
    %v139 = vmul.f32 %v46, %v132
    %v140 = vmul.f32 %v46, %v136
    %v141 = vmul.f32 %v51, %v132
    %v142 = vmul.f32 %v51, %v136
    %v143 = vmul.f32 %v56, %v132
    %v144 = vmul.f32 %v56, %v136
    %v145 = vmul.f32 %v61, %v132
    %v146 = vmul.f32 %v61, %v136
    %v147 = vmul.f32 %v66, %v132
    %v148 = vmul.f32 %v66, %v136
    %v149 = vmul.f32 %v71, %v132
    %v150 = vmul.f32 %v71, %v136
    %v151 = vmul.f32 %v76, %v132
    %v152 = vmul.f32 %v76, %v136
    %v153 = vmul.f32 %v81, %v132
    %v154 = vmul.f32 %v81, %v136
    %v155 = vmul.f32 %v86, %v132
    %v156 = vmul.f32 %v86, %v136
    %v157 = vmul.f32 %v91, %v132
    %v158 = vmul.f32 %v91, %v136
    %v159 = vmul.f32 %v96, %v132
    %v160 = vmul.f32 %v96, %v136
    %v161 = vmul.f32 %v101, %v132
    %v162 = vmul.f32 %v101, %v136
    %v163 = vmul.f32 %v106, %v132
    %v164 = vmul.f32 %v106, %v136
    %v165 = vmul.f32 %v111, %v132
    %v166 = vmul.f32 %v111, %v136
    %v167 = vmul.f32 %v116, %v132
    %v168 = vmul.f32 %v116, %v136
    %v169 = vld [vmem:[%s2] sm:$0xff]
    %v170 = vld [vmem:[%s2 + $0x8] sm:$0xff]
    %v171 = vld [vmem:[%s2 + $0x10] sm:$0xff]
    %v172 = vld [vmem:[%s2 + $0x18] sm:$0xff]
    %v173 = vld [vmem:[%s2 + $0x20] sm:$0xff]
    %v174 = vld [vmem:[%s2 + $0x28] sm:$0xff]
    %v175 = vld [vmem:[%s2 + $0x30] sm:$0xff]
    %v176 = vld [vmem:[%s2 + $0x38] sm:$0xff]
    %v177 = vld [vmem:[%s2 + $0x40] sm:$0xff]
    %v178 = vld [vmem:[%s2 + $0x48] sm:$0xff]
    %v179 = vld [vmem:[%s2 + $0x50] sm:$0xff]
    %v180 = vld [vmem:[%s2 + $0x58] sm:$0xff]
    %v181 = vld [vmem:[%s2 + $0x60] sm:$0xff]
    %v182 = vld [vmem:[%s2 + $0x68] sm:$0xff]
    %v183 = vld [vmem:[%s2 + $0x70] sm:$0xff]
    %v184 = vld [vmem:[%s2 + $0x78] sm:$0xff]
    %186 = vset.pattern.permute.xlu0 0
    %187 = vperm.xlu0 %186, %v169
    %v188 = vpop.permute.xlu0 %187
    %191 = vset.pattern.permute.xlu0 0
    %192 = vperm.xlu0 %191, %v170
    %v193 = vpop.permute.xlu0 %192
    %196 = vset.pattern.permute.xlu0 0
    %197 = vperm.xlu0 %196, %v171
    %v198 = vpop.permute.xlu0 %197
    %201 = vset.pattern.permute.xlu0 0
    %202 = vperm.xlu0 %201, %v172
    %v203 = vpop.permute.xlu0 %202
    %206 = vset.pattern.permute.xlu0 0
    %207 = vperm.xlu0 %206, %v173
    %v208 = vpop.permute.xlu0 %207
    %211 = vset.pattern.permute.xlu0 0
    %212 = vperm.xlu0 %211, %v174
    %v213 = vpop.permute.xlu0 %212
    %216 = vset.pattern.permute.xlu0 0
    %217 = vperm.xlu0 %216, %v175
    %v218 = vpop.permute.xlu0 %217
    %221 = vset.pattern.permute.xlu0 0
    %222 = vperm.xlu0 %221, %v176
    %v223 = vpop.permute.xlu0 %222
    %226 = vset.pattern.permute.xlu0 0
    %227 = vperm.xlu0 %226, %v177
    %v228 = vpop.permute.xlu0 %227
    %231 = vset.pattern.permute.xlu0 0
    %232 = vperm.xlu0 %231, %v178
    %v233 = vpop.permute.xlu0 %232
    %236 = vset.pattern.permute.xlu0 0
    %237 = vperm.xlu0 %236, %v179
    %v238 = vpop.permute.xlu0 %237
    %241 = vset.pattern.permute.xlu0 0
    %242 = vperm.xlu0 %241, %v180
    %v243 = vpop.permute.xlu0 %242
    %246 = vset.pattern.permute.xlu0 0
    %247 = vperm.xlu0 %246, %v181
    %v248 = vpop.permute.xlu0 %247
    %251 = vset.pattern.permute.xlu0 0
    %252 = vperm.xlu0 %251, %v182
    %v253 = vpop.permute.xlu0 %252
    %256 = vset.pattern.permute.xlu0 0
    %257 = vperm.xlu0 %256, %v183
    %v258 = vpop.permute.xlu0 %257
    %261 = vset.pattern.permute.xlu0 0
    %262 = vperm.xlu0 %261, %v184
    %v263 = vpop.permute.xlu0 %262
    %v265 = vadd.f32 %v137, %v188
    %v266 = vadd.f32 %v138, %v188
    %v267 = vadd.f32 %v139, %v193
    %v268 = vadd.f32 %v140, %v193
    %v269 = vadd.f32 %v141, %v198
    %v270 = vadd.f32 %v142, %v198
    %v271 = vadd.f32 %v143, %v203
    %v272 = vadd.f32 %v144, %v203
    %v273 = vadd.f32 %v145, %v208
    %v274 = vadd.f32 %v146, %v208
    %v275 = vadd.f32 %v147, %v213
    %v276 = vadd.f32 %v148, %v213
    %v277 = vadd.f32 %v149, %v218
    %v278 = vadd.f32 %v150, %v218
    %v279 = vadd.f32 %v151, %v223
    %v280 = vadd.f32 %v152, %v223
    %v281 = vadd.f32 %v153, %v228
    %v282 = vadd.f32 %v154, %v228
    %v283 = vadd.f32 %v155, %v233
    %v284 = vadd.f32 %v156, %v233
    %v285 = vadd.f32 %v157, %v238
    %v286 = vadd.f32 %v158, %v238
    %v287 = vadd.f32 %v159, %v243
    %v288 = vadd.f32 %v160, %v243
    %v289 = vadd.f32 %v161, %v248
    %v290 = vadd.f32 %v162, %v248
    %v291 = vadd.f32 %v163, %v253
    %v292 = vadd.f32 %v164, %v253
    %v293 = vadd.f32 %v165, %v258
    %v294 = vadd.f32 %v166, %v258
    %v295 = vadd.f32 %v167, %v263
    %v296 = vadd.f32 %v168, %v263
    %297 = vset.pattern.permute.xlu0 1
    %298 = vperm.xlu0 %297, %v22
    %v299 = vpop.permute.xlu0 %298
    %301 = vset.pattern.permute.xlu0 1
    %302 = vperm.xlu0 %301, %v23
    %v303 = vpop.permute.xlu0 %302
    %305 = vset.pattern.permute.xlu0 1
    %306 = vperm.xlu0 %305, %v24
    %v307 = vpop.permute.xlu0 %306
    %309 = vset.pattern.permute.xlu0 1
    %310 = vperm.xlu0 %309, %v25
    %v311 = vpop.permute.xlu0 %310
    %313 = vset.pattern.permute.xlu0 1
    %314 = vperm.xlu0 %313, %v26
    %v315 = vpop.permute.xlu0 %314
    %317 = vset.pattern.permute.xlu0 1
    %318 = vperm.xlu0 %317, %v27
    %v319 = vpop.permute.xlu0 %318
    %321 = vset.pattern.permute.xlu0 1
    %322 = vperm.xlu0 %321, %v28
    %v323 = vpop.permute.xlu0 %322
    %325 = vset.pattern.permute.xlu0 1
    %326 = vperm.xlu0 %325, %v29
    %v327 = vpop.permute.xlu0 %326
    %329 = vset.pattern.permute.xlu0 1
    %330 = vperm.xlu0 %329, %v30
    %v331 = vpop.permute.xlu0 %330
    %333 = vset.pattern.permute.xlu0 1
    %334 = vperm.xlu0 %333, %v31
    %v335 = vpop.permute.xlu0 %334
    %337 = vset.pattern.permute.xlu0 1
    %338 = vperm.xlu0 %337, %v32
    %v339 = vpop.permute.xlu0 %338
    %341 = vset.pattern.permute.xlu0 1
    %342 = vperm.xlu0 %341, %v33
    %v343 = vpop.permute.xlu0 %342
    %345 = vset.pattern.permute.xlu0 1
    %346 = vperm.xlu0 %345, %v34
    %v347 = vpop.permute.xlu0 %346
    %349 = vset.pattern.permute.xlu0 1
    %350 = vperm.xlu0 %349, %v35
    %v351 = vpop.permute.xlu0 %350
    %353 = vset.pattern.permute.xlu0 1
    %354 = vperm.xlu0 %353, %v36
    %v355 = vpop.permute.xlu0 %354
    %357 = vset.pattern.permute.xlu0 1
    %358 = vperm.xlu0 %357, %v37
    %v359 = vpop.permute.xlu0 %358
    %v361 = vlaneseq
    %v362 = vshrl.u32 %v361, 7
    %v363 = vsub.s32 1, %v362
    %v364 = vrot.slane %v21, %v363
    %v365 = vlaneseq
    %v366 = vshrl.u32 %v365, 7
    %v367 = vsub.s32 5, %v366
    %v368 = vrot.slane %v21, %v367
    %v371 = vlaneseq
    %v372 = vshrl.u32 %v371, 7
    %v373 = vsub.s32 1, %v372
    %v374 = vrot.slane %v364, %v373
    %v375 = vlaneseq
    %v376 = vshrl.u32 %v375, 7
    %v377 = vsub.s32 1, %v376
    %v378 = vrot.slane %v368, %v377
    %v379 = vmul.f32 %v299, %v374
    %v380 = vmul.f32 %v299, %v378
    %v381 = vmul.f32 %v303, %v374
    %v382 = vmul.f32 %v303, %v378
    %v383 = vmul.f32 %v307, %v374
    %v384 = vmul.f32 %v307, %v378
    %v385 = vmul.f32 %v311, %v374
    %v386 = vmul.f32 %v311, %v378
    %v387 = vmul.f32 %v315, %v374
    %v388 = vmul.f32 %v315, %v378
    %v389 = vmul.f32 %v319, %v374
    %v390 = vmul.f32 %v319, %v378
    %v391 = vmul.f32 %v323, %v374
    %v392 = vmul.f32 %v323, %v378
    %v393 = vmul.f32 %v327, %v374
    %v394 = vmul.f32 %v327, %v378
    %v395 = vmul.f32 %v331, %v374
    %v396 = vmul.f32 %v331, %v378
    %v397 = vmul.f32 %v335, %v374
    %v398 = vmul.f32 %v335, %v378
    %v399 = vmul.f32 %v339, %v374
    %v400 = vmul.f32 %v339, %v378
    %v401 = vmul.f32 %v343, %v374
    %v402 = vmul.f32 %v343, %v378
    %v403 = vmul.f32 %v347, %v374
    %v404 = vmul.f32 %v347, %v378
    %v405 = vmul.f32 %v351, %v374
    %v406 = vmul.f32 %v351, %v378
    %v407 = vmul.f32 %v355, %v374
    %v408 = vmul.f32 %v355, %v378
    %v409 = vmul.f32 %v359, %v374
    %v410 = vmul.f32 %v359, %v378
    %v411 = vadd.f32 %v265, %v379
    %v412 = vadd.f32 %v266, %v380
    %v413 = vadd.f32 %v267, %v381
    %v414 = vadd.f32 %v268, %v382
    %v415 = vadd.f32 %v269, %v383
    %v416 = vadd.f32 %v270, %v384
    %v417 = vadd.f32 %v271, %v385
    %v418 = vadd.f32 %v272, %v386
    %v419 = vadd.f32 %v273, %v387
    %v420 = vadd.f32 %v274, %v388
    %v421 = vadd.f32 %v275, %v389
    %v422 = vadd.f32 %v276, %v390
    %v423 = vadd.f32 %v277, %v391
    %v424 = vadd.f32 %v278, %v392
    %v425 = vadd.f32 %v279, %v393
    %v426 = vadd.f32 %v280, %v394
    %v427 = vadd.f32 %v281, %v395
    %v428 = vadd.f32 %v282, %v396
    %v429 = vadd.f32 %v283, %v397
    %v430 = vadd.f32 %v284, %v398
    %v431 = vadd.f32 %v285, %v399
    %v432 = vadd.f32 %v286, %v400
    %v433 = vadd.f32 %v287, %v401
    %v434 = vadd.f32 %v288, %v402
    %v435 = vadd.f32 %v289, %v403
    %v436 = vadd.f32 %v290, %v404
    %v437 = vadd.f32 %v291, %v405
    %v438 = vadd.f32 %v292, %v406
    %v439 = vadd.f32 %v293, %v407
    %v440 = vadd.f32 %v294, %v408
    %v441 = vadd.f32 %v295, %v409
    %v442 = vadd.f32 %v296, %v410
    %443 = vset.pattern.permute.xlu0 2
    %444 = vperm.xlu0 %443, %v22
    %v445 = vpop.permute.xlu0 %444
    %447 = vset.pattern.permute.xlu0 2
    %448 = vperm.xlu0 %447, %v23
    %v449 = vpop.permute.xlu0 %448
    %451 = vset.pattern.permute.xlu0 2
    %452 = vperm.xlu0 %451, %v24
    %v453 = vpop.permute.xlu0 %452
    %455 = vset.pattern.permute.xlu0 2
    %456 = vperm.xlu0 %455, %v25
    %v457 = vpop.permute.xlu0 %456
    %459 = vset.pattern.permute.xlu0 2
    %460 = vperm.xlu0 %459, %v26
    %v461 = vpop.permute.xlu0 %460
    %463 = vset.pattern.permute.xlu0 2
    %464 = vperm.xlu0 %463, %v27
    %v465 = vpop.permute.xlu0 %464
    %467 = vset.pattern.permute.xlu0 2
    %468 = vperm.xlu0 %467, %v28
    %v469 = vpop.permute.xlu0 %468
    %471 = vset.pattern.permute.xlu0 2
    %472 = vperm.xlu0 %471, %v29
    %v473 = vpop.permute.xlu0 %472
    %475 = vset.pattern.permute.xlu0 2
    %476 = vperm.xlu0 %475, %v30
    %v477 = vpop.permute.xlu0 %476
    %479 = vset.pattern.permute.xlu0 2
    %480 = vperm.xlu0 %479, %v31
    %v481 = vpop.permute.xlu0 %480
    %483 = vset.pattern.permute.xlu0 2
    %484 = vperm.xlu0 %483, %v32
    %v485 = vpop.permute.xlu0 %484
    %487 = vset.pattern.permute.xlu0 2
    %488 = vperm.xlu0 %487, %v33
    %v489 = vpop.permute.xlu0 %488
    %491 = vset.pattern.permute.xlu0 2
    %492 = vperm.xlu0 %491, %v34
    %v493 = vpop.permute.xlu0 %492
    %495 = vset.pattern.permute.xlu0 2
    %496 = vperm.xlu0 %495, %v35
    %v497 = vpop.permute.xlu0 %496
    %499 = vset.pattern.permute.xlu0 2
    %500 = vperm.xlu0 %499, %v36
    %v501 = vpop.permute.xlu0 %500
    %503 = vset.pattern.permute.xlu0 2
    %504 = vperm.xlu0 %503, %v37
    %v505 = vpop.permute.xlu0 %504
    %v507 = vlaneseq
    %v508 = vshrl.u32 %v507, 7
    %v509 = vsub.s32 2, %v508
    %v510 = vrot.slane %v21, %v509
    %v511 = vlaneseq
    %v512 = vshrl.u32 %v511, 7
    %v513 = vsub.s32 6, %v512
    %v514 = vrot.slane %v21, %v513
    %v517 = vlaneseq
    %v518 = vshrl.u32 %v517, 7
    %v519 = vsub.s32 2, %v518
    %v520 = vrot.slane %v510, %v519
    %v521 = vlaneseq
    %v522 = vshrl.u32 %v521, 7
    %v523 = vsub.s32 2, %v522
    %v524 = vrot.slane %v514, %v523
    %v525 = vmul.f32 %v445, %v520
    %v526 = vmul.f32 %v445, %v524
    %v527 = vmul.f32 %v449, %v520
    %v528 = vmul.f32 %v449, %v524
    %v529 = vmul.f32 %v453, %v520
    %v530 = vmul.f32 %v453, %v524
    %v531 = vmul.f32 %v457, %v520
    %v532 = vmul.f32 %v457, %v524
    %v533 = vmul.f32 %v461, %v520
    %v534 = vmul.f32 %v461, %v524
    %v535 = vmul.f32 %v465, %v520
    %v536 = vmul.f32 %v465, %v524
    %v537 = vmul.f32 %v469, %v520
    %v538 = vmul.f32 %v469, %v524
    %v539 = vmul.f32 %v473, %v520
    %v540 = vmul.f32 %v473, %v524
    %v541 = vmul.f32 %v477, %v520
    %v542 = vmul.f32 %v477, %v524
    %v543 = vmul.f32 %v481, %v520
    %v544 = vmul.f32 %v481, %v524
    %v545 = vmul.f32 %v485, %v520
    %v546 = vmul.f32 %v485, %v524
    %v547 = vmul.f32 %v489, %v520
    %v548 = vmul.f32 %v489, %v524
    %v549 = vmul.f32 %v493, %v520
    %v550 = vmul.f32 %v493, %v524
    %v551 = vmul.f32 %v497, %v520
    %v552 = vmul.f32 %v497, %v524
    %v553 = vmul.f32 %v501, %v520
    %v554 = vmul.f32 %v501, %v524
    %v555 = vmul.f32 %v505, %v520
    %v556 = vmul.f32 %v505, %v524
    %v557 = vadd.f32 %v411, %v525
    %v558 = vadd.f32 %v412, %v526
    %v559 = vadd.f32 %v413, %v527
    %v560 = vadd.f32 %v414, %v528
    %v561 = vadd.f32 %v415, %v529
    %v562 = vadd.f32 %v416, %v530
    %v563 = vadd.f32 %v417, %v531
    %v564 = vadd.f32 %v418, %v532
    %v565 = vadd.f32 %v419, %v533
    %v566 = vadd.f32 %v420, %v534
    %v567 = vadd.f32 %v421, %v535
    %v568 = vadd.f32 %v422, %v536
    %v569 = vadd.f32 %v423, %v537
    %v570 = vadd.f32 %v424, %v538
    %v571 = vadd.f32 %v425, %v539
    %v572 = vadd.f32 %v426, %v540
    %v573 = vadd.f32 %v427, %v541
    %v574 = vadd.f32 %v428, %v542
    %v575 = vadd.f32 %v429, %v543
    %v576 = vadd.f32 %v430, %v544
    %v577 = vadd.f32 %v431, %v545
    %v578 = vadd.f32 %v432, %v546
    %v579 = vadd.f32 %v433, %v547
    %v580 = vadd.f32 %v434, %v548
    %v581 = vadd.f32 %v435, %v549
    %v582 = vadd.f32 %v436, %v550
    %v583 = vadd.f32 %v437, %v551
    %v584 = vadd.f32 %v438, %v552
    %v585 = vadd.f32 %v439, %v553
    %v586 = vadd.f32 %v440, %v554
    %v587 = vadd.f32 %v441, %v555
    %v588 = vadd.f32 %v442, %v556
    %589 = vset.pattern.permute.xlu0 3
    %590 = vperm.xlu0 %589, %v22
    %v591 = vpop.permute.xlu0 %590
    %593 = vset.pattern.permute.xlu0 3
    %594 = vperm.xlu0 %593, %v23
    %v595 = vpop.permute.xlu0 %594
    %597 = vset.pattern.permute.xlu0 3
    %598 = vperm.xlu0 %597, %v24
    %v599 = vpop.permute.xlu0 %598
    %601 = vset.pattern.permute.xlu0 3
    %602 = vperm.xlu0 %601, %v25
    %v603 = vpop.permute.xlu0 %602
    %605 = vset.pattern.permute.xlu0 3
    %606 = vperm.xlu0 %605, %v26
    %v607 = vpop.permute.xlu0 %606
    %609 = vset.pattern.permute.xlu0 3
    %610 = vperm.xlu0 %609, %v27
    %v611 = vpop.permute.xlu0 %610
    %613 = vset.pattern.permute.xlu0 3
    %614 = vperm.xlu0 %613, %v28
    %v615 = vpop.permute.xlu0 %614
    %617 = vset.pattern.permute.xlu0 3
    %618 = vperm.xlu0 %617, %v29
    %v619 = vpop.permute.xlu0 %618
    %621 = vset.pattern.permute.xlu0 3
    %622 = vperm.xlu0 %621, %v30
    %v623 = vpop.permute.xlu0 %622
    %625 = vset.pattern.permute.xlu0 3
    %626 = vperm.xlu0 %625, %v31
    %v627 = vpop.permute.xlu0 %626
    %629 = vset.pattern.permute.xlu0 3
    %630 = vperm.xlu0 %629, %v32
    %v631 = vpop.permute.xlu0 %630
    %633 = vset.pattern.permute.xlu0 3
    %634 = vperm.xlu0 %633, %v33
    %v635 = vpop.permute.xlu0 %634
    %637 = vset.pattern.permute.xlu0 3
    %638 = vperm.xlu0 %637, %v34
    %v639 = vpop.permute.xlu0 %638
    %641 = vset.pattern.permute.xlu0 3
    %642 = vperm.xlu0 %641, %v35
    %v643 = vpop.permute.xlu0 %642
    %645 = vset.pattern.permute.xlu0 3
    %646 = vperm.xlu0 %645, %v36
    %v647 = vpop.permute.xlu0 %646
    %649 = vset.pattern.permute.xlu0 3
    %650 = vperm.xlu0 %649, %v37
    %v651 = vpop.permute.xlu0 %650
    %v653 = vlaneseq
    %v654 = vshrl.u32 %v653, 7
    %v655 = vsub.s32 3, %v654
    %v656 = vrot.slane %v21, %v655
    %v657 = vlaneseq
    %v658 = vshrl.u32 %v657, 7
    %v659 = vsub.s32 7, %v658
    %v660 = vrot.slane %v21, %v659
    %v663 = vlaneseq
    %v664 = vshrl.u32 %v663, 7
    %v665 = vsub.s32 3, %v664
    %v666 = vrot.slane %v656, %v665
    %v667 = vlaneseq
    %v668 = vshrl.u32 %v667, 7
    %v669 = vsub.s32 3, %v668
    %v670 = vrot.slane %v660, %v669
    %v671 = vmul.f32 %v591, %v666
    %v672 = vmul.f32 %v591, %v670
    %v673 = vmul.f32 %v595, %v666
    %v674 = vmul.f32 %v595, %v670
    %v675 = vmul.f32 %v599, %v666
    %v676 = vmul.f32 %v599, %v670
    %v677 = vmul.f32 %v603, %v666
    %v678 = vmul.f32 %v603, %v670
    %v679 = vmul.f32 %v607, %v666
    %v680 = vmul.f32 %v607, %v670
    %v681 = vmul.f32 %v611, %v666
    %v682 = vmul.f32 %v611, %v670
    %v683 = vmul.f32 %v615, %v666
    %v684 = vmul.f32 %v615, %v670
    %v685 = vmul.f32 %v619, %v666
    %v686 = vmul.f32 %v619, %v670
    %v687 = vmul.f32 %v623, %v666
    %v688 = vmul.f32 %v623, %v670
    %v689 = vmul.f32 %v627, %v666
    %v690 = vmul.f32 %v627, %v670
    %v691 = vmul.f32 %v631, %v666
    %v692 = vmul.f32 %v631, %v670
    %v693 = vmul.f32 %v635, %v666
    %v694 = vmul.f32 %v635, %v670
    %v695 = vmul.f32 %v639, %v666
    %v696 = vmul.f32 %v639, %v670
    %v697 = vmul.f32 %v643, %v666
    %v698 = vmul.f32 %v643, %v670
    %v699 = vmul.f32 %v647, %v666
    %v700 = vmul.f32 %v647, %v670
    %v701 = vmul.f32 %v651, %v666
    %v702 = vmul.f32 %v651, %v670
    %v703 = vadd.f32 %v557, %v671
    %v704 = vadd.f32 %v558, %v672
    %v705 = vadd.f32 %v559, %v673
    %v706 = vadd.f32 %v560, %v674
    %v707 = vadd.f32 %v561, %v675
    %v708 = vadd.f32 %v562, %v676
    %v709 = vadd.f32 %v563, %v677
    %v710 = vadd.f32 %v564, %v678
    %v711 = vadd.f32 %v565, %v679
    %v712 = vadd.f32 %v566, %v680
    %v713 = vadd.f32 %v567, %v681
    %v714 = vadd.f32 %v568, %v682
    %v715 = vadd.f32 %v569, %v683
    %v716 = vadd.f32 %v570, %v684
    %v717 = vadd.f32 %v571, %v685
    %v718 = vadd.f32 %v572, %v686
    %v719 = vadd.f32 %v573, %v687
    %v720 = vadd.f32 %v574, %v688
    %v721 = vadd.f32 %v575, %v689
    %v722 = vadd.f32 %v576, %v690
    %v723 = vadd.f32 %v577, %v691
    %v724 = vadd.f32 %v578, %v692
    %v725 = vadd.f32 %v579, %v693
    %v726 = vadd.f32 %v580, %v694
    %v727 = vadd.f32 %v581, %v695
    %v728 = vadd.f32 %v582, %v696
    %v729 = vadd.f32 %v583, %v697
    %v730 = vadd.f32 %v584, %v698
    %v731 = vadd.f32 %v585, %v699
    %v732 = vadd.f32 %v586, %v700
    %v733 = vadd.f32 %v587, %v701
    %v734 = vadd.f32 %v588, %v702
    %v735 = vmax.f32 %v703, 0.0
    %v736 = vmax.f32 %v704, 0.0
    %v737 = vmax.f32 %v705, 0.0
    %v738 = vmax.f32 %v706, 0.0
    %v739 = vmax.f32 %v707, 0.0
    %v740 = vmax.f32 %v708, 0.0
    %v741 = vmax.f32 %v709, 0.0
    %v742 = vmax.f32 %v710, 0.0
    %v743 = vmax.f32 %v711, 0.0
    %v744 = vmax.f32 %v712, 0.0
    %v745 = vmax.f32 %v713, 0.0
    %v746 = vmax.f32 %v714, 0.0
    %v747 = vmax.f32 %v715, 0.0
    %v748 = vmax.f32 %v716, 0.0
    %v749 = vmax.f32 %v717, 0.0
    %v750 = vmax.f32 %v718, 0.0
    %v751 = vmax.f32 %v719, 0.0
    %v752 = vmax.f32 %v720, 0.0
    %v753 = vmax.f32 %v721, 0.0
    %v754 = vmax.f32 %v722, 0.0
    %v755 = vmax.f32 %v723, 0.0
    %v756 = vmax.f32 %v724, 0.0
    %v757 = vmax.f32 %v725, 0.0
    %v758 = vmax.f32 %v726, 0.0
    %v759 = vmax.f32 %v727, 0.0
    %v760 = vmax.f32 %v728, 0.0
    %v761 = vmax.f32 %v729, 0.0
    %v762 = vmax.f32 %v730, 0.0
    %v763 = vmax.f32 %v731, 0.0
    %v764 = vmax.f32 %v732, 0.0
    %v765 = vmax.f32 %v733, 0.0
    %v766 = vmax.f32 %v734, 0.0
    %v767 = vld [vmem:[%s3] sm:$0xff]
    %v768 = vld [vmem:[%s4] sm:$0xff]
    %770 = vset.pattern.permute.xlu0 0
    %771 = vperm.xlu0 %770, %v768
    %v772 = vpop.permute.xlu0 %771
    %774 = vmatprep.subr.mxu0 %v736
    %775 = vmatpush1.msra.mxu0 %v735
    %776 = vmatprep.subr.mxu0 %v738
    %777 = vmatpush1.msra.mxu0 %v737
    %778 = vmatprep.subr.mxu0 %v740
    %779 = vmatpush1.msra.mxu0 %v739
    %780 = vmatprep.subr.mxu0 %v742
    %781 = vmatpush1.msra.mxu0 %v741
    %782 = vmatprep.subr.mxu0 %v744
    %783 = vmatpush1.msra.mxu0 %v743
    %784 = vmatprep.subr.mxu0 %v746
    %785 = vmatpush1.msra.mxu0 %v745
    %786 = vmatprep.subr.mxu0 %v748
    %787 = vmatpush1.msra.mxu0 %v747
    %788 = vmatprep.subr.mxu0 %v750
    %789 = vmatpush1.msra.mxu0 %v749
    %790 = vmatprep.subr.mxu0 %v752
    %791 = vmatpush1.msra.mxu0 %v751
    %792 = vmatprep.subr.mxu0 %v754
    %793 = vmatpush1.msra.mxu0 %v753
    %794 = vmatprep.subr.mxu0 %v756
    %795 = vmatpush1.msra.mxu0 %v755
    %796 = vmatprep.subr.mxu0 %v758
    %797 = vmatpush1.msra.mxu0 %v757
    %798 = vmatprep.subr.mxu0 %v760
    %799 = vmatpush1.msra.mxu0 %v759
    %800 = vmatprep.subr.mxu0 %v762
    %801 = vmatpush1.msra.mxu0 %v761
    %802 = vmatprep.subr.mxu0 %v764
    %803 = vmatpush1.msra.mxu0 %v763
    %804 = vmatprep.subr.mxu0 %v766
    %805 = vmatpush1.msra.mxu0 %v765
    %806 = vmatprep.subr.mxu0 0.0
    %807 = vmatpush1.msra.mxu0 0.0
    %808 = vmatprep.subr.mxu0 0.0
    %809 = vmatpush1.msra.mxu0 0.0
    %810 = vmatprep.subr.mxu0 0.0
    %811 = vmatpush1.msra.mxu0 0.0
    %812 = vmatprep.subr.mxu0 0.0
    %813 = vmatpush1.msra.mxu0 0.0
    %814 = vmatprep.subr.mxu0 0.0
    %815 = vmatpush1.msra.mxu0 0.0
    %816 = vmatprep.subr.mxu0 0.0
    %817 = vmatpush1.msra.mxu0 0.0
    %818 = vmatprep.subr.mxu0 0.0
    %819 = vmatpush1.msra.mxu0 0.0
    %820 = vmatprep.subr.mxu0 0.0
    %821 = vmatpush1.msra.mxu0 0.0
    %822 = vmatprep.subr.mxu0 0.0
    %823 = vmatpush1.msra.mxu0 0.0
    %824 = vmatprep.subr.mxu0 0.0
    %825 = vmatpush1.msra.mxu0 0.0
    %826 = vmatprep.subr.mxu0 0.0
    %827 = vmatpush1.msra.mxu0 0.0
    %828 = vmatprep.subr.mxu0 0.0
    %829 = vmatpush1.msra.mxu0 0.0
    %830 = vmatprep.subr.mxu0 0.0
    %831 = vmatpush1.msra.mxu0 0.0
    %832 = vmatprep.subr.mxu0 0.0
    %833 = vmatpush1.msra.mxu0 0.0
    %834 = vmatprep.subr.mxu0 0.0
    %835 = vmatpush1.msra.mxu0 0.0
    %836 = vmatprep.subr.mxu0 0.0
    %837 = vmatpush1.msra.mxu0 0.0
    %838 = vmatprep.mubr.f32.mxu0 0.0
    %839 = vmatmul.mubr.f32.gmra.mrb[0].mxu0 %v767
    %v840 = vpop.f32.mrb[0].mxu0
    %v841 = vadd.f32 %v772, %v840
    %v842 = vpop.f32.mrb[0].mxu0
    %v843 = vadd.f32 %v772, %v842
    %844 = vdwg.mxu0
    %845 = vst [vmem:[#allocation2] sm:$0xff] %v841
    %vm846 = vcmask 588800
    %847 = vst.msk [vmem:[#allocation2 + $0x8] sm:$0xff] %vm846, %v843
    // Predicated region
    $region22: #{tpu_custom_call.1} parent=1 // pred_check
      _
    $region23: #{tpu_custom_call.1} parent=1 // pred_check_branch
      %849 = sbr.rel (0) target = $region25
    $region24: #{tpu_custom_call.1} parent=1 // pred_region
      %s851 = ssub.s32 256, 256
      %852 = vsyncadd [#allocation3], %s851
      %s854 = sshll.u32 [#allocation2], 4
      %s855 = int_to_ptr.vmem [resolvable:$true] %s854
      %857 = dma.vmem_to_hbm [thread:$0]  %s855, 256, %s5, [#allocation3]
    $region25: #{tpu_custom_call.1} parent=1 // pred_fallthru
      _
    // Predicated region
    $region26: #{tpu_custom_call.1} parent=1 // pred_check
      _
    $region27: #{tpu_custom_call.1} parent=1 // pred_check_branch
      %859 = sbr.rel (0) target = $region29
    $region28: #{tpu_custom_call.1} parent=1 // pred_region
      %860 = dma.done [#allocation3], 256
    $region29: #{tpu_custom_call.1} parent=1 // pred_fallthru
      _
    %861 = vsyncpa [#allocation3], 1

</llo_original>
